<compile_context>
chip_gen: v7x
topology: tpu7x:2x2x1
jax: 0.10.0
libtpu: 0.0.40
codegen_flags: <defaults>
</compile_context>

<pallas_src>
import jax
import jax.numpy as jnp
from jax import lax
from jax.experimental import pallas as pl
from jax.experimental.pallas import tpu as pltpu


# ----------------------------- Pass 1 kernel -----------------------------
def conv_stats_kernel(xp_ref, w_ref, b_ref, conv_ref, stats_ref):
    # xp_ref:   [1, L+4, C]  bf16  (circularly padded input, one batch)
    # w_ref:    [3C, C]      bf16  (taps stacked along the reduction axis)
    # b_ref:    [1, C]       f32
    # conv_ref: [1, Lc, C]   f32   (conv + bias output)
    # stats_ref:[1, 2, C]    f32   (per-batch [sum, sum_sq] over Lc)
    xp = xp_ref[0]                       # [L+4, C] bf16
    Lpad = xp.shape[0]
    Lc = Lpad - 2

    # Fused 3-tap conv: build a [Lc, 3C] operand from three shifted views and
    # run a single MXU matmul with K = 3C (better systolic-depth utilization
    # than three separate [Lc,C]x[C,C] matmuls).
    xcat = jnp.concatenate(
        [xp[0:Lc, :], xp[1:Lc + 1, :], xp[2:Lc + 2, :]], axis=-1)  # [Lc, 3C]
    conv = jnp.dot(xcat, w_ref[...], preferred_element_type=jnp.float32)
    conv = conv + b_ref[...]             # broadcast [1, C]
    conv_ref[0] = conv

    # Per-channel partial BatchNorm stats for this batch element (XLU reduce).
    s1 = jnp.sum(conv, axis=0, keepdims=True)          # [1, C]
    s2 = jnp.sum(conv * conv, axis=0, keepdims=True)   # [1, C]
    stats_ref[0] = jnp.concatenate([s1, s2], axis=0)   # [2, C]


# ----------------------------- Pass 2 kernel -----------------------------
def bn_elu_pool_kernel(conv_ref, st_ref, o_ref, yp_ref):
    # conv_ref: [1, Lc, C] f32
    # st_ref:   [2, C]     f32  (row 0 = folded BN scale, row 1 = shift)
    # o_ref:    [1, Lp, C]
    # yp_ref:   VMEM scratch [Lc+2, C] f32 (pool-padded buffer)
    conv = conv_ref[0]                   # [Lc, C]
    Lc = conv.shape[0]
    C = conv.shape[1]
    Lp = o_ref.shape[1]

    scale = st_ref[pl.ds(0, 1), :]       # [1, C]
    shift = st_ref[pl.ds(1, 1), :]       # [1, C]

    # Folded BatchNorm (single FMA) + ELU(alpha=1), all f32 on the VPU/EUP.
    y = conv * scale + shift
    y = jnp.where(y > 0, y, jnp.exp(jnp.minimum(y, 0.0)) - 1.0)

    # MaxPool1d(k=3, s=2, p=1): write y into a pool-padded scratch, then take
    # the elementwise max of three sublane-strided views (stride 2).
    neg = jnp.full((1, C), -jnp.inf, jnp.float32)
    yp_ref[pl.ds(0, 1), :] = neg
    yp_ref[pl.ds(Lc + 1, 1), :] = neg
    yp_ref[pl.ds(1, Lc), :] = y

    left = yp_ref[pl.ds(0, Lp, stride=2), :]    # rows 2i-1 of y (pad at i=0)
    center = yp_ref[pl.ds(1, Lp, stride=2), :]  # rows 2i
    right = yp_ref[pl.ds(2, Lp, stride=2), :]   # rows 2i+1 (pad at the end)
    pooled = jnp.maximum(jnp.maximum(left, center), right)
    o_ref[0] = pooled.astype(o_ref.dtype)


# ------------------------------- Wrapper ---------------------------------
@jax.jit
def conv_layer_forward(x, w_t, bias, gamma, beta):
    """x: [B, L, C]; w_t: [3, C_in, C_out]; bias/gamma/beta: [C]."""
    eps = 1e-5
    B, L, C = x.shape
    assert L >= 2, "circular padding of 2 requires L >= 2"
    Lc = L + 2
    Lp = (Lc - 1) // 2 + 1

    # Circular padding (pad=2 each side) done once in HBM by XLA; bf16 halves
    # the DMA bytes of the dominant input and feeds the MXU natively.
    xp = jnp.concatenate([x[:, L - 2:, :], x, x[:, :2, :]], axis=1)  # [B, L+4, C]
    xp_b = xp.astype(jnp.bfloat16)
    w_cat = jnp.reshape(w_t, (3 * C, C)).astype(jnp.bfloat16)        # [3C, C]
    bias_f32 = jnp.reshape(bias, (1, C)).astype(jnp.float32)

    # ---- Pass 1: conv (+bias) and per-batch BN stat partials ----
    conv, stats = pl.pallas_call(
        conv_stats_kernel,
        out_shape=(jax.ShapeDtypeStruct((B, Lc, C), jnp.float32),
                   jax.ShapeDtypeStruct((B, 2, C), jnp.float32)),
        grid_spec=pltpu.PrefetchScalarGridSpec(
            num_scalar_prefetch=0,
            grid=(B,),
            in_specs=[pl.BlockSpec((1, L + 4, C), lambda b: (b, 0, 0)),
                      pl.BlockSpec((3 * C, C), lambda b: (0, 0)),
                      pl.BlockSpec((1, C), lambda b: (0, 0))],
            out_specs=[pl.BlockSpec((1, Lc, C), lambda b: (b, 0, 0)),
                       pl.BlockSpec((1, 2, C), lambda b: (b, 0, 0))]),
        compiler_params=pltpu.CompilerParams(
            dimension_semantics=("parallel",)),
    )(xp_b, w_cat, bias_f32)

    # ---- Tiny XLA glue: global BN stats -> folded per-channel scale/shift ----
    # TODO(synk): running_mean / running_var buffer updates of BatchNorm1d are
    # not emulated (they do not affect the training-mode forward output).
    n = jnp.float32(B * Lc)
    ssum = jnp.sum(stats, axis=0)                      # [2, C]
    mean = ssum[0] / n
    var = jnp.maximum(ssum[1] / n - mean * mean, 0.0)  # biased batch variance
    scale = jnp.reshape(gamma, (C,)).astype(jnp.float32) * lax.rsqrt(var + eps)
    shift = jnp.reshape(beta, (C,)).astype(jnp.float32) - mean * scale
    bn_st = jnp.stack([scale, shift], axis=0)          # [2, C], one operand

    # ---- Pass 2: folded BN + ELU + MaxPool(k=3, s=2, p=1) ----
    out = pl.pallas_call(
        bn_elu_pool_kernel,
        out_shape=jax.ShapeDtypeStruct((B, Lp, C), x.dtype),
        grid_spec=pltpu.PrefetchScalarGridSpec(
            num_scalar_prefetch=0,
            grid=(B,),
            in_specs=[pl.BlockSpec((1, Lc, C), lambda b: (b, 0, 0)),
                      pl.BlockSpec((2, C), lambda b: (0, 0))],
            out_specs=pl.BlockSpec((1, Lp, C), lambda b: (b, 0, 0)),
            scratch_shapes=[pltpu.VMEM((Lc + 2, C), jnp.float32)]),
        compiler_params=pltpu.CompilerParams(
            dimension_semantics=("parallel",)),
    )(conv, bn_st)
    return out


# ------------------------------ Reference --------------------------------
def conv_layer_reference(x, w_t, bias, gamma, beta, eps=1e-5):
    """Pure-jnp reference (same bf16 conv precision, two-pass variance)."""
    B, L, C = x.shape
    Lc = L + 2
    xp = jnp.concatenate([x[:, L - 2:, :], x, x[:, :2, :]], axis=1)
    xp_b = xp.astype(jnp.bfloat16)
    w_b = w_t.astype(jnp.bfloat16)
    out = sum(jnp.einsum('blc,cd->bld', xp_b[:, k:k + Lc, :], w_b[k],
                         preferred_element_type=jnp.float32) for k in range(3))
    out = out + bias.reshape(1, 1, C)
    mean = jnp.mean(out, axis=(0, 1), keepdims=True)
    var = jnp.mean((out - mean) ** 2, axis=(0, 1), keepdims=True)
    y = (out - mean) / jnp.sqrt(var + eps)
    y = y * gamma.reshape(1, 1, C) + beta.reshape(1, 1, C)
    y = jnp.where(y > 0, y, jnp.exp(jnp.minimum(y, 0.0)) - 1.0)
    neg = jnp.full((B, 1, C), -jnp.inf, jnp.float32)
    yp = jnp.concatenate([neg, y, neg], axis=1)
    Lp = (Lc - 1) // 2 + 1
    return jnp.stack([jnp.max(yp[:, 2 * i:2 * i + 3, :], axis=1)
                      for i in range(Lp)], axis=1)


if __name__ == "__main__":
    # Small but lane-dense demo shape: C = 128 keeps the last axis a full vreg
    # lane width (masked-store-free epilogue).
    B, L, C = 2, 24, 128

    key = jax.random.PRNGKey(0)
    kx, kw, kb = jax.random.split(key, 3)

    x = jax.random.normal(kx, (B, L, C), dtype=jnp.float32)

    # Conv1d params: weight [C_out, C_in, 3], bias [C]; PyTorch-style uniform init.
    fan_in = C * 3
    bound = 1.0 / (fan_in ** 0.5)
    w_conv = jax.random.uniform(kw, (C, C, 3), jnp.float32, -bound, bound)
    b_conv = jax.random.uniform(kb, (C,), jnp.float32, -bound, bound)
    # Rearrange to [k, C_in, C_out]; wrapper stacks taps into a [3C, C] operand.
    w_t = jnp.transpose(w_conv, (2, 1, 0))

    # BatchNorm1d affine params (fresh-module defaults).
    gamma = jnp.ones((C,), jnp.float32)
    beta = jnp.zeros((C,), jnp.float32)

    out = conv_layer_forward(x, w_t, b_conv, gamma, beta)
    out = jax.block_until_ready(out)

    ref = conv_layer_reference(x, w_t, b_conv, gamma, beta)
    assert out.shape == (B, (L + 1) // 2 + 1, C), out.shape
    assert jnp.allclose(out, ref, atol=2e-3, rtol=2e-3), \
        f"mismatch vs reference, max abs err = {jnp.max(jnp.abs(out - ref))}"

    print("KERNEL_OK")
</pallas_src>

<mosaic_0001>
module attributes {stable_mosaic.version = 11 : i64} {
  func.func @conv_stats_kernel(%arg0: i32, %arg1: memref<1x28x128xbf16, #tpu.memory_space<vmem>>, %arg2: memref<384x128xbf16, #tpu.memory_space<vmem>>, %arg3: memref<1x128xf32, #tpu.memory_space<vmem>>, %arg4: memref<1x26x128xf32, #tpu.memory_space<vmem>>, %arg5: memref<1x2x128xf32, #tpu.memory_space<vmem>>) attributes {dimension_semantics = [#tpu.dimension_semantics<parallel>], iteration_bounds = array<i64: 2>, scalar_prefetch = 0 : i64, scratch_operands = 0 : i64, tpu.core_type = #tpu.core_type<tc>, window_params = [{transform_indices = @transform_0, window_bounds = array<i64: 1, 28, 128>}, {pipeline_mode = #tpu.pipeline_mode<synchronous>, transform_indices = @transform_1, window_bounds = array<i64: 384, 128>}, {pipeline_mode = #tpu.pipeline_mode<synchronous>, transform_indices = @transform_2, window_bounds = array<i64: 1, 128>}, {transform_indices = @transform_3, window_bounds = array<i64: 1, 26, 128>}, {transform_indices = @transform_4, window_bounds = array<i64: 1, 2, 128>}]} {
    %c0 = arith.constant 0 : index
    %c0_0 = arith.constant 0 : index
    %c0_1 = arith.constant 0 : index
    %0 = vector.load %arg1[%c0, %c0_0, %c0_1] : memref<1x28x128xbf16, #tpu.memory_space<vmem>>, vector<1x28x128xbf16>
    %1 = vector.shape_cast %0 : vector<1x28x128xbf16> to vector<28x128xbf16>
    %2 = vector.extract_strided_slice %1 {offsets = [0, 0], sizes = [26, 128], strides = [1, 1]} : vector<28x128xbf16> to vector<26x128xbf16>
    %3 = vector.extract_strided_slice %1 {offsets = [1, 0], sizes = [26, 128], strides = [1, 1]} : vector<28x128xbf16> to vector<26x128xbf16>
    %4 = vector.extract_strided_slice %1 {offsets = [2, 0], sizes = [26, 128], strides = [1, 1]} : vector<28x128xbf16> to vector<26x128xbf16>
    %5 = tpu.concatenate %2, %3, %4 in 1 : vector<26x128xbf16>, vector<26x128xbf16>, vector<26x128xbf16> -> vector<26x384xbf16>
    %c0_2 = arith.constant 0 : index
    %c0_3 = arith.constant 0 : index
    %6 = vector.load %arg2[%c0_2, %c0_3] : memref<384x128xbf16, #tpu.memory_space<vmem>>, vector<384x128xbf16>
    %cst = arith.constant dense<0.000000e+00> : vector<26x128xf32>
    %7 = tpu.matmul %5, %6, %cst {dimension_numbers = #tpu.dot_dimension_numbers<[1], [0], [0], [1], [0, 0, 1, 1], [], []>} : vector<26x384xbf16>, vector<384x128xbf16>, vector<26x128xf32> -> vector<26x128xf32>
    %c0_4 = arith.constant 0 : index
    %c0_5 = arith.constant 0 : index
    %8 = vector.load %arg3[%c0_4, %c0_5] : memref<1x128xf32, #tpu.memory_space<vmem>>, vector<1x128xf32>
    %9 = vector.broadcast %8 : vector<1x128xf32> to vector<26x128xf32>
    %10 = arith.addf %7, %9 : vector<26x128xf32>
    %c0_6 = arith.constant 0 : index
    %c0_7 = arith.constant 0 : index
    %c0_8 = arith.constant 0 : index
    %11 = vector.load %arg4[%c0_6, %c0_7, %c0_8] : memref<1x26x128xf32, #tpu.memory_space<vmem>>, vector<1x26x128xf32>
    %12 = vector.shape_cast %11 : vector<1x26x128xf32> to vector<26x128xf32>
    %13 = vector.shape_cast %10 : vector<26x128xf32> to vector<1x26x128xf32>
    tpu.vector_store %arg4[%c0_6, %c0_7, %c0_8], %13 {strides = array<i32>} : memref<1x26x128xf32, #tpu.memory_space<vmem>>, vector<1x26x128xf32>,
    %cst_9 = arith.constant dense<0.000000e+00> : vector<128xf32>
    %14 = vector.multi_reduction <add>, %10, %cst_9 [0] : vector<26x128xf32> to vector<128xf32>
    %15 = vector.shape_cast %14 : vector<128xf32> to vector<1x128xf32>
    %16 = arith.mulf %10, %10 : vector<26x128xf32>
    %cst_10 = arith.constant dense<0.000000e+00> : vector<128xf32>
    %17 = vector.multi_reduction <add>, %16, %cst_10 [0] : vector<26x128xf32> to vector<128xf32>
    %18 = vector.shape_cast %17 : vector<128xf32> to vector<1x128xf32>
    %19 = tpu.concatenate %15, %18 in 0 : vector<1x128xf32>, vector<1x128xf32> -> vector<2x128xf32>
    %c0_11 = arith.constant 0 : index
    %c0_12 = arith.constant 0 : index
    %c0_13 = arith.constant 0 : index
    %20 = vector.load %arg5[%c0_11, %c0_12, %c0_13] : memref<1x2x128xf32, #tpu.memory_space<vmem>>, vector<1x2x128xf32>
    %21 = vector.shape_cast %20 : vector<1x2x128xf32> to vector<2x128xf32>
    %22 = vector.shape_cast %19 : vector<2x128xf32> to vector<1x2x128xf32>
    tpu.vector_store %arg5[%c0_11, %c0_12, %c0_13], %22 {strides = array<i32>} : memref<1x2x128xf32, #tpu.memory_space<vmem>>, vector<1x2x128xf32>,
    return
  }
  func.func @transform_0(%arg0: i32) -> (i32, i32, i32) {
    %c0_i32 = arith.constant 0 : i32
    %c0_i32_0 = arith.constant 0 : i32
    %c0_i32_1 = arith.constant 0 : i32
    return %arg0, %c0_i32, %c0_i32_0 : i32, i32, i32
  }
  func.func @transform_1(%arg0: i32) -> (i32, i32) {
    %c0_i32 = arith.constant 0 : i32
    %c0_i32_0 = arith.constant 0 : i32
    %c0_i32_1 = arith.constant 0 : i32
    return %c0_i32, %c0_i32_0 : i32, i32
  }
  func.func @transform_2(%arg0: i32) -> (i32, i32) {
    %c0_i32 = arith.constant 0 : i32
    %c0_i32_0 = arith.constant 0 : i32
    %c0_i32_1 = arith.constant 0 : i32
    return %c0_i32, %c0_i32_0 : i32, i32
  }
  func.func @transform_3(%arg0: i32) -> (i32, i32, i32) {
    %c0_i32 = arith.constant 0 : i32
    %c0_i32_0 = arith.constant 0 : i32
    %c0_i32_1 = arith.constant 0 : i32
    return %arg0, %c0_i32, %c0_i32_0 : i32, i32, i32
  }
  func.func @transform_4(%arg0: i32) -> (i32, i32, i32) {
    %c0_i32 = arith.constant 0 : i32
    %c0_i32_0 = arith.constant 0 : i32
    %c0_i32_1 = arith.constant 0 : i32
    return %arg0, %c0_i32, %c0_i32_0 : i32, i32, i32
  }
}

module attributes {stable_mosaic.version = 11 : i64} {
  func.func @bn_elu_pool_kernel(%arg0: i32, %arg1: memref<1x26x128xf32, #tpu.memory_space<vmem>>, %arg2: memref<2x128xf32, #tpu.memory_space<vmem>>, %arg3: memref<1x13x128xf32, #tpu.memory_space<vmem>>, %arg4: memref<28x128xf32, #tpu.memory_space<vmem>>) attributes {dimension_semantics = [#tpu.dimension_semantics<parallel>], iteration_bounds = array<i64: 2>, scalar_prefetch = 0 : i64, scratch_operands = 1 : i64, tpu.core_type = #tpu.core_type<tc>, window_params = [{transform_indices = @transform_0, window_bounds = array<i64: 1, 26, 128>}, {pipeline_mode = #tpu.pipeline_mode<synchronous>, transform_indices = @transform_1, window_bounds = array<i64: 2, 128>}, {transform_indices = @transform_2, window_bounds = array<i64: 1, 13, 128>}]} {
    %c0 = arith.constant 0 : index
    %c0_0 = arith.constant 0 : index
    %c0_1 = arith.constant 0 : index
    %0 = vector.load %arg1[%c0, %c0_0, %c0_1] : memref<1x26x128xf32, #tpu.memory_space<vmem>>, vector<1x26x128xf32>
    %1 = vector.shape_cast %0 : vector<1x26x128xf32> to vector<26x128xf32>
    %c0_2 = arith.constant 0 : index
    %c0_3 = arith.constant 0 : index
    %2 = vector.load %arg2[%c0_2, %c0_3] : memref<2x128xf32, #tpu.memory_space<vmem>>, vector<1x128xf32>
    %c1 = arith.constant 1 : index
    %c0_4 = arith.constant 0 : index
    %3 = vector.load %arg2[%c1, %c0_4] : memref<2x128xf32, #tpu.memory_space<vmem>>, vector<1x128xf32>
    %4 = vector.broadcast %2 : vector<1x128xf32> to vector<26x128xf32>
    %5 = arith.mulf %1, %4 : vector<26x128xf32>
    %6 = vector.broadcast %3 : vector<1x128xf32> to vector<26x128xf32>
    %7 = arith.addf %5, %6 : vector<26x128xf32>
    %cst = arith.constant 0.000000e+00 : f32
    %8 = vector.broadcast %cst : f32 to vector<26x128xf32>
    %9 = arith.cmpf ogt, %7, %8 : vector<26x128xf32>
    %cst_5 = arith.constant 0.000000e+00 : f32
    %10 = vector.broadcast %cst_5 : f32 to vector<26x128xf32>
    %11 = arith.minimumf %7, %10 : vector<26x128xf32>
    %12 = math.exp %11 : vector<26x128xf32>
    %cst_6 = arith.constant 1.000000e+00 : f32
    %13 = vector.broadcast %cst_6 : f32 to vector<26x128xf32>
    %14 = arith.subf %12, %13 : vector<26x128xf32>
    %15 = arith.select %9, %7, %14 : vector<26x128xi1>, vector<26x128xf32>
    %cst_7 = arith.constant 0xFF800000 : f32
    %16 = vector.broadcast %cst_7 : f32 to vector<1x128xf32>
    %c0_8 = arith.constant 0 : index
    %c0_9 = arith.constant 0 : index
    %17 = vector.load %arg4[%c0_8, %c0_9] : memref<28x128xf32, #tpu.memory_space<vmem>>, vector<1x128xf32>
    tpu.vector_store %arg4[%c0_8, %c0_9], %16 {strides = array<i32>} : memref<28x128xf32, #tpu.memory_space<vmem>>, vector<1x128xf32>,
    %c27 = arith.constant 27 : index
    %c0_10 = arith.constant 0 : index
    %18 = vector.load %arg4[%c27, %c0_10] : memref<28x128xf32, #tpu.memory_space<vmem>>, vector<1x128xf32>
    tpu.vector_store %arg4[%c27, %c0_10], %16 {strides = array<i32>} : memref<28x128xf32, #tpu.memory_space<vmem>>, vector<1x128xf32>,
    %c1_11 = arith.constant 1 : index
    %c0_12 = arith.constant 0 : index
    %19 = vector.load %arg4[%c1_11, %c0_12] : memref<28x128xf32, #tpu.memory_space<vmem>>, vector<26x128xf32>
    tpu.vector_store %arg4[%c1_11, %c0_12], %15 {strides = array<i32>} : memref<28x128xf32, #tpu.memory_space<vmem>>, vector<26x128xf32>,
    %c0_13 = arith.constant 0 : index
    %c0_14 = arith.constant 0 : index
    %20 = tpu.strided_load %arg4[%c0_13, %c0_14] {strides = array<i32: 2, 1>} : memref<28x128xf32, #tpu.memory_space<vmem>>, vector<13x128xf32>
    %c1_15 = arith.constant 1 : index
    %c0_16 = arith.constant 0 : index
    %21 = tpu.strided_load %arg4[%c1_15, %c0_16] {strides = array<i32: 2, 1>} : memref<28x128xf32, #tpu.memory_space<vmem>>, vector<13x128xf32>
    %c2 = arith.constant 2 : index
    %c0_17 = arith.constant 0 : index
    %22 = tpu.strided_load %arg4[%c2, %c0_17] {strides = array<i32: 2, 1>} : memref<28x128xf32, #tpu.memory_space<vmem>>, vector<13x128xf32>
    %23 = arith.maximumf %20, %21 : vector<13x128xf32>
    %24 = arith.maximumf %23, %22 : vector<13x128xf32>
    %c0_18 = arith.constant 0 : index
    %c0_19 = arith.constant 0 : index
    %c0_20 = arith.constant 0 : index
    %25 = vector.load %arg3[%c0_18, %c0_19, %c0_20] : memref<1x13x128xf32, #tpu.memory_space<vmem>>, vector<1x13x128xf32>
    %26 = vector.shape_cast %25 : vector<1x13x128xf32> to vector<13x128xf32>
    %27 = vector.shape_cast %24 : vector<13x128xf32> to vector<1x13x128xf32>
    tpu.vector_store %arg3[%c0_18, %c0_19, %c0_20], %27 {strides = array<i32>} : memref<1x13x128xf32, #tpu.memory_space<vmem>>, vector<1x13x128xf32>,
    return
  }
  func.func @transform_0(%arg0: i32) -> (i32, i32, i32) {
    %c0_i32 = arith.constant 0 : i32
    %c0_i32_0 = arith.constant 0 : i32
    %c0_i32_1 = arith.constant 0 : i32
    return %arg0, %c0_i32, %c0_i32_0 : i32, i32, i32
  }
  func.func @transform_1(%arg0: i32) -> (i32, i32) {
    %c0_i32 = arith.constant 0 : i32
    %c0_i32_0 = arith.constant 0 : i32
    %c0_i32_1 = arith.constant 0 : i32
    return %c0_i32, %c0_i32_0 : i32, i32
  }
  func.func @transform_2(%arg0: i32) -> (i32, i32, i32) {
    %c0_i32 = arith.constant 0 : i32
    %c0_i32_0 = arith.constant 0 : i32
    %c0_i32_1 = arith.constant 0 : i32
    return %arg0, %c0_i32, %c0_i32_0 : i32, i32, i32
  }
}

</mosaic_0001>

<llo_original>
// kernel: conv_layer_forward.3
$region0: #{conv_layer_forward.3}
  #allocation0 [shape = 'u32[]', space=smem, size = 0x4, offset = 0x4, fixed_abs, tag = 'smem constant byte address 0x4 - core index']
  #allocation1 [shape = 'u32[144,128]{1,0:T(1,128)}', space=vmem, size = 0x12000, scoped, tag = 'internal scratch']
  #allocation2 [shape = 'f32[28,128]{1,0:T(8,128)}', space=vmem, size = 0x4000, scoped, tag = 'scratch operand']
  %s0 = inlined_call_operand.vmem [shape: f32[2,26,128], index: 0, kind: input, shape index: {}]
  %s1 = inlined_call_operand.vmem [shape: f32[2,128], index: 1, kind: input, shape index: {}]
  %s2 = inlined_call_operand.vmem [shape: f32[2,13,128], index: 2, kind: output, shape index: {}]
  %s3 = sld [smem:[#allocation0]]
  $region41: #{conv_layer_forward.3} parent=0
    _
  %s5 = ssub.s32 1, %s3
  %s6 = scalar_select 0, %s5, %s3
  loop: start=0, step=1, limit=4
  $region2: #{conv_layer_forward.3} parent=0 // loop_pre_header
    _
  $region3: #{conv_layer_forward.3} parent=0 // loop_header
    %s8 = sphi 0, %s12
    %p9 = scmp.ge.s32.totalorder %s8, 4
    %s18 = sphi 0, %s20
    %s21 = sphi 0, %s18
    %s22 = sphi 0, %s21
    %s38 = sphi 0, %s22
    %s42 = sphi 0, %s42
    %s44 = sphi 0, %s42
    %s45 = sphi 0, %s44
    %s59 = sphi 0, %s45
    %s65 = sphi 0, %s67
    %s68 = sphi 0, %s65
    %s69 = sphi 0, %s68
    %s85 = sphi 0, %s69
  $region4: #{conv_layer_forward.3} parent=0 // loop_header_branch
    %11 = sbr.rel (%p9) target = $region8
  $region5: #{conv_layer_forward.3} parent=0 // loop_body
    %s13 = ssub.s32 %s8, 1
    %s14 = ssub.s32 %s8, 2
    %s15 = sadd.s32 %s8, 1
    %s16 = ssub.s32 %s8, %s15
    %p17 = scmp.eq.s32.totalorder %s16, 0
    %s19 = sadd.s32 %s18, 1
    %s20 = scalar_select %p17, %s18, %s19
    %p23 = pneg %p17
    %p24 = scmp.eq.s32.totalorder %s8, 1
    %p25 = por %p23, %p24
    %p26 = scmp.ne.s32.totalorder %s18, %s21
    %p27 = scmp.eq.s32.totalorder %s8, 0
    %p28 = por %p26, %p27
    %p29 = scmp.ne.s32.totalorder %s18, %s21
    %p30 = scmp.eq.s32.totalorder %s13, 1
    %p31 = por %p29, %p30
    %p32 = scmp.ne.s32.totalorder %s21, %s22
    %p33 = scmp.eq.s32.totalorder %s13, 0
    %p34 = por %p32, %p33
    %p35 = scmp.ne.s32.totalorder %s21, %s22
    %p36 = scmp.eq.s32.totalorder %s14, 1
    %p37 = por %p35, %p36
    %p39 = scmp.ne.s32.totalorder %s22, %s38
    %p40 = scmp.eq.s32.totalorder %s14, 0
    %p41 = por %p39, %p40
    %s43 = sadd.s32 %s42, 1
    %p46 = scmp.eq.s32.totalorder %s8, 1
    %p47 = scmp.ne.s32.totalorder %s42, %s44
    %p48 = scmp.eq.s32.totalorder %s8, 0
    %p49 = por %p47, %p48
    %p50 = scmp.ne.s32.totalorder %s42, %s44
    %p51 = scmp.eq.s32.totalorder %s13, 1
    %p52 = por %p50, %p51
    %p53 = scmp.ne.s32.totalorder %s44, %s45
    %p54 = scmp.eq.s32.totalorder %s13, 0
    %p55 = por %p53, %p54
    %p56 = scmp.ne.s32.totalorder %s44, %s45
    %p57 = scmp.eq.s32.totalorder %s14, 1
    %p58 = por %p56, %p57
    %p60 = scmp.ne.s32.totalorder %s45, %s59
    %p61 = scmp.eq.s32.totalorder %s14, 0
    %p62 = por %p60, %p61
    %s63 = ssub.s32 %s8, %s15
    %p64 = scmp.eq.s32.totalorder %s63, 0
    %s66 = sadd.s32 %s65, 1
    %s67 = scalar_select %p64, %s65, %s66
    %p70 = pneg %p64
    %p71 = scmp.eq.s32.totalorder %s8, 1
    %p72 = por %p70, %p71
    %p73 = scmp.ne.s32.totalorder %s65, %s68
    %p74 = scmp.eq.s32.totalorder %s8, 0
    %p75 = por %p73, %p74
    %p76 = scmp.ne.s32.totalorder %s65, %s68
    %p77 = scmp.eq.s32.totalorder %s13, 1
    %p78 = por %p76, %p77
    %p79 = scmp.ne.s32.totalorder %s68, %s69
    %p80 = scmp.eq.s32.totalorder %s13, 0
    %p81 = por %p79, %p80
    %p82 = scmp.ne.s32.totalorder %s68, %s69
    %p83 = scmp.eq.s32.totalorder %s14, 1
    %p84 = por %p82, %p83
    %p86 = scmp.ne.s32.totalorder %s69, %s85
    %p87 = scmp.eq.s32.totalorder %s14, 0
    %p88 = por %p86, %p87
    %p89 = scmp.le.s32.totalorder 1, %s8
    %p90 = scmp.lt.s32.totalorder %s8, 3
    %p91 = pnand %p89, %p90
    %p92 = pneg %p91
    // Predicated region
    $region9: #{conv_layer_forward.3} parent=5 // pred_check
      _
    $region10: #{conv_layer_forward.3} parent=5 // pred_check_branch
      %94 = sbr.rel (%p91) target = $region12
    $region11: #{conv_layer_forward.3} parent=5 // pred_region
      %s95 = ssub.s32 %s8, 1
      // Predicated region
      $region13: #{conv_layer_forward.3} parent=11 // pred_check
        %p96 = pneg %p55
      $region14: #{conv_layer_forward.3} parent=11 // pred_check_branch
        %98 = sbr.rel (%p96) target = $region16
      $region15: #{conv_layer_forward.3} parent=11 // pred_region
        _
      $region16: #{conv_layer_forward.3} parent=11 // pred_fallthru
        _
    $region12: #{conv_layer_forward.3} parent=5 // pred_fallthru
      _
    %p99 = scmp.lt.s32.totalorder %s8, 2
    // Predicated region
    $region17: #{conv_layer_forward.3} parent=5 // pred_check
      %p100 = pneg %p99
    $region18: #{conv_layer_forward.3} parent=5 // pred_check_branch
      %102 = sbr.rel (%p100) target = $region20
    $region19: #{conv_layer_forward.3} parent=5 // pred_region
      // Predicated region
      $region21: #{conv_layer_forward.3} parent=19 // pred_check
        %p103 = pneg %p28
      $region22: #{conv_layer_forward.3} parent=19 // pred_check_branch
        %105 = sbr.rel (%p103) target = $region24
      $region23: #{conv_layer_forward.3} parent=19 // pred_region
        %p106 = scmp.lt.s32.totalorder %s8, 1
        %s107 = scalar_select %p106, %s8, 1
        %s108 = smul.addr %s107, 4
        %s109 = smul.addr %s108, 8
        %s110 = scalar_lea.vmem %s0, %s109
      $region24: #{conv_layer_forward.3} parent=19 // pred_fallthru
        _
    $region20: #{conv_layer_forward.3} parent=5 // pred_fallthru
      _
    %p111 = scmp.le.s32.totalorder 1, %s8
    %p112 = scmp.lt.s32.totalorder %s8, 3
    %p113 = pnand %p111, %p112
    %p114 = pneg %p113
    // Predicated region
    $region25: #{conv_layer_forward.3} parent=5 // pred_check
      _
    $region26: #{conv_layer_forward.3} parent=5 // pred_check_branch
      %116 = sbr.rel (%p113) target = $region28
    $region27: #{conv_layer_forward.3} parent=5 // pred_region
      %s117 = ssub.s32 %s8, 1
      %p118 = scmp.lt.s32.totalorder %s13, 1
      %s119 = scalar_select %p118, %s13, 1
      %s120 = smul.addr %s119, 4
      %s121 = smul.addr %s120, 8
      %s122 = scalar_lea.vmem %s0, %s121
      %p123 = pneg %p34
      %p124 = pneg %p31
      %p125 = pneg %p55
      %p126 = pneg %p52
      %p127 = pneg %p81
      %p128 = pneg %p78
      %p129 = scmp.lt.s32.totalorder %s13, 1
      %s130 = scalar_select %p129, %s13, 1
      %s131 = smul.addr %s130, 2
      %s132 = smul.addr %s131, 8
      %s133 = scalar_lea.vmem %s2, %s132
      %p134 = scmp.lt.s32.totalorder %s13, 1
      %s135 = scalar_select %p134, %s13, 1
      %s136 = smul.addr %s135, 4
      %s137 = smul.addr %s136, 8
      %s138 = scalar_lea.vmem %s0, %s137
      %p139 = scmp.lt.s32.totalorder %s13, 1
      %s140 = scalar_select %p139, %s13, 1
      %s141 = smul.addr %s140, 2
      %s142 = smul.addr %s141, 8
      %s143 = scalar_lea.vmem %s2, %s142
      %v144 = vld [vmem:[%s138] sm:$0xff]
      %v145 = vld [vmem:[%s138 + $0x8] sm:$0xff]
      %v146 = vld [vmem:[%s138 + $0x10] sm:$0xff]
      %v147 = vld [vmem:[%s138 + $0x18] sm:$0x3]
      %v148 = vld [vmem:[%s1] sm:$0x1]
      %v149 = vld [vmem:[%s1 + $0x1] sm:$0x1]
      %v150 = vlaneseq
      %v151 = vshrl.u32 %v150, 7
      %v152 = vsub.s32 0, %v151
      %v153 = vrot.slane %v148, %v152
      %v154 = vmul.f32 %v144, %v153
      %v155 = vmul.f32 %v145, %v153
      %v156 = vmul.f32 %v146, %v153
      %v157 = vmul.f32 %v147, %v153
      %v158 = vlaneseq
      %v159 = vshrl.u32 %v158, 7
      %v160 = vsub.s32 0, %v159
      %v161 = vrot.slane %v149, %v160
      %v162 = vadd.f32 %v154, %v161
      %v163 = vadd.f32 %v155, %v161
      %v164 = vadd.f32 %v156, %v161
      %v165 = vadd.f32 %v157, %v161
      %vm166 = vcmp.gt.f32.partialorder %v162, 0.0
      %vm167 = vcmp.gt.f32.partialorder %v163, 0.0
      %vm168 = vcmp.gt.f32.partialorder %v164, 0.0
      %vm169 = vcmp.gt.f32.partialorder %v165, 0.0
      %v170 = vmin.f32 %v162, 0.0
      %v171 = vmin.f32 %v163, 0.0
      %v172 = vmin.f32 %v164, 0.0
      %v173 = vmin.f32 %v165, 0.0
      %v174 = vmul.f32 %v170, 1.442695
      %v175 = vpow.pop %v174
      %v176 = vmul.f32 %v171, 1.442695
      %v177 = vpow.pop %v176
      %v178 = vmul.f32 %v172, 1.442695
      %v179 = vpow.pop %v178
      %v180 = vmul.f32 %v173, 1.442695
      %v181 = vpow.pop %v180
      %v182 = vsub.f32 %v175, 1.0
      %v183 = vsub.f32 %v177, 1.0
      %v184 = vsub.f32 %v179, 1.0
      %v185 = vsub.f32 %v181, 1.0
      %v186 = vsel %vm166, %v162, %v182
      %v187 = vsel %vm167, %v163, %v183
      %v188 = vsel %vm168, %v164, %v184
      %v189 = vsel %vm169, %v165, %v185
      %190 = vst [vmem:[#allocation2] sm:$0x1] -inf
      %191 = vst [vmem:[#allocation2 + $0x1b] sm:$0x1] -inf
      %192 = vst [vmem:[#allocation2 + $0x1] sm:$0xff] %v186
      %193 = vst [vmem:[#allocation2 + $0x9] sm:$0xff] %v187
      %194 = vst [vmem:[#allocation2 + $0x11] sm:$0xff] %v188
      %195 = vst [vmem:[#allocation2 + $0x19] sm:$0x3] %v189
      %v196 = vld [vmem:[#allocation2] ss:$2 sm:$0xff]
      %s197 = scalar_lea.vmem [#allocation2], 16
      %v198 = vld [vmem:[%s197] ss:$2 sm:$0x1f]
      %s199 = scalar_lea.vmem [#allocation2], 1
      %v200 = vld [vmem:[%s199] ss:$2 sm:$0xff]
      %s201 = scalar_lea.vmem [#allocation2], 17
      %v202 = vld [vmem:[%s201] ss:$2 sm:$0x1f]
      %s203 = scalar_lea.vmem [#allocation2], 2
      %v204 = vld [vmem:[%s203] ss:$2 sm:$0xff]
      %s205 = scalar_lea.vmem [#allocation2], 18
      %v206 = vld [vmem:[%s205] ss:$2 sm:$0x1f]
      %v207 = vmax.f32 %v196, %v200
      %v208 = vmax.f32 %v198, %v202
      %v209 = vmax.f32 %v207, %v204
      %v210 = vmax.f32 %v208, %v206
      %211 = vst [vmem:[%s143] sm:$0xff] %v209
      %212 = vst [vmem:[%s143 + $0x8] sm:$0x1f] %v210
      %p213 = scmp.lt.s32.totalorder %s13, 1
      %s214 = scalar_select %p213, %s13, 1
      %s215 = smul.addr %s214, 2
      %s216 = smul.addr %s215, 8
      %s217 = scalar_lea.vmem %s2, %s216
      // Predicated region
      $region29: #{conv_layer_forward.3} parent=27 // pred_check
        %p218 = pneg %p78
      $region30: #{conv_layer_forward.3} parent=27 // pred_check_branch
        %220 = sbr.rel (%p218) target = $region32
      $region31: #{conv_layer_forward.3} parent=27 // pred_region
        _
      $region32: #{conv_layer_forward.3} parent=27 // pred_fallthru
        _
    $region28: #{conv_layer_forward.3} parent=5 // pred_fallthru
      _
    %p221 = scmp.le.s32.totalorder 2, %s8
    // Predicated region
    $region33: #{conv_layer_forward.3} parent=5 // pred_check
      %p222 = pneg %p221
    $region34: #{conv_layer_forward.3} parent=5 // pred_check_branch
      %224 = sbr.rel (%p222) target = $region36
    $region35: #{conv_layer_forward.3} parent=5 // pred_region
      %s225 = ssub.s32 %s8, 2
      // Predicated region
      $region37: #{conv_layer_forward.3} parent=35 // pred_check
        %p226 = pneg %p84
      $region38: #{conv_layer_forward.3} parent=35 // pred_check_branch
        %228 = sbr.rel (%p226) target = $region40
      $region39: #{conv_layer_forward.3} parent=35 // pred_region
        %p229 = scmp.lt.s32.totalorder %s14, 1
        %s230 = scalar_select %p229, %s14, 1
        %s231 = smul.addr %s230, 2
        %s232 = smul.addr %s231, 8
        %s233 = scalar_lea.vmem %s2, %s232
      $region40: #{conv_layer_forward.3} parent=35 // pred_fallthru
        _
    $region36: #{conv_layer_forward.3} parent=5 // pred_fallthru
      _
  $region6: #{conv_layer_forward.3} parent=0 // loop_footer
    %s12 = sadd.s32 1, %s8
  $region7: #{conv_layer_forward.3} parent=0 // loop_footer_branch
    %7 = sbr.rel target = $region3
  $region8: #{conv_layer_forward.3} parent=0 // loop_exit
    _

// kernel: conv_layer_forward.2
$region0: #{conv_layer_forward.2}
  #allocation0 [shape = 'u32[]', space=smem, size = 0x4, offset = 0x4, fixed_abs, tag = 'smem constant byte address 0x4 - core index']
  #allocation1 [shape = 'u32[144,128]{1,0:T(1,128)}', space=vmem, size = 0x12000, scoped, tag = 'internal scratch']
  %s0 = inlined_call_operand.vmem [shape: bf16[2,28,128], index: 0, kind: input, shape index: {}]
  %s1 = inlined_call_operand.vmem [shape: bf16[384,128], index: 1, kind: input, shape index: {}]
  %s2 = inlined_call_operand.vmem [shape: f32[1,128], index: 2, kind: input, shape index: {}]
  %s3 = inlined_call_operand.vmem [shape: f32[2,26,128], index: 3, kind: output, shape index: {0}]
  %s4 = inlined_call_operand.vmem [shape: f32[2,2,128], index: 4, kind: output, shape index: {1}]
  %5 = xla_tuple %s3, %s4
  %s6 = sld [smem:[#allocation0]]
  $region53: #{conv_layer_forward.2} parent=0
    _
  %s8 = ssub.s32 1, %s6
  %s9 = scalar_select 0, %s8, %s6
  loop: start=0, step=1, limit=4
  $region2: #{conv_layer_forward.2} parent=0 // loop_pre_header
    _
  $region3: #{conv_layer_forward.2} parent=0 // loop_header
    %s11 = sphi 0, %s15
    %p12 = scmp.ge.s32.totalorder %s11, 4
    %s21 = sphi 0, %s23
    %s24 = sphi 0, %s21
    %s25 = sphi 0, %s24
    %s41 = sphi 0, %s25
    %s45 = sphi 0, %s45
    %s47 = sphi 0, %s45
    %s48 = sphi 0, %s47
    %s62 = sphi 0, %s48
    %s66 = sphi 0, %s66
    %s68 = sphi 0, %s66
    %s69 = sphi 0, %s68
    %s83 = sphi 0, %s69
    %s89 = sphi 0, %s91
    %s92 = sphi 0, %s89
    %s93 = sphi 0, %s92
    %s109 = sphi 0, %s93
    %s115 = sphi 0, %s117
    %s118 = sphi 0, %s115
    %s119 = sphi 0, %s118
    %s135 = sphi 0, %s119
  $region4: #{conv_layer_forward.2} parent=0 // loop_header_branch
    %14 = sbr.rel (%p12) target = $region8
  $region5: #{conv_layer_forward.2} parent=0 // loop_body
    %s16 = ssub.s32 %s11, 1
    %s17 = ssub.s32 %s11, 2
    %s18 = sadd.s32 %s11, 1
    %s19 = ssub.s32 %s11, %s18
    %p20 = scmp.eq.s32.totalorder %s19, 0
    %s22 = sadd.s32 %s21, 1
    %s23 = scalar_select %p20, %s21, %s22
    %p26 = pneg %p20
    %p27 = scmp.eq.s32.totalorder %s11, 1
    %p28 = por %p26, %p27
    %p29 = scmp.ne.s32.totalorder %s21, %s24
    %p30 = scmp.eq.s32.totalorder %s11, 0
    %p31 = por %p29, %p30
    %p32 = scmp.ne.s32.totalorder %s21, %s24
    %p33 = scmp.eq.s32.totalorder %s16, 1
    %p34 = por %p32, %p33
    %p35 = scmp.ne.s32.totalorder %s24, %s25
    %p36 = scmp.eq.s32.totalorder %s16, 0
    %p37 = por %p35, %p36
    %p38 = scmp.ne.s32.totalorder %s24, %s25
    %p39 = scmp.eq.s32.totalorder %s17, 1
    %p40 = por %p38, %p39
    %p42 = scmp.ne.s32.totalorder %s25, %s41
    %p43 = scmp.eq.s32.totalorder %s17, 0
    %p44 = por %p42, %p43
    %s46 = sadd.s32 %s45, 1
    %p49 = scmp.eq.s32.totalorder %s11, 1
    %p50 = scmp.ne.s32.totalorder %s45, %s47
    %p51 = scmp.eq.s32.totalorder %s11, 0
    %p52 = por %p50, %p51
    %p53 = scmp.ne.s32.totalorder %s45, %s47
    %p54 = scmp.eq.s32.totalorder %s16, 1
    %p55 = por %p53, %p54
    %p56 = scmp.ne.s32.totalorder %s47, %s48
    %p57 = scmp.eq.s32.totalorder %s16, 0
    %p58 = por %p56, %p57
    %p59 = scmp.ne.s32.totalorder %s47, %s48
    %p60 = scmp.eq.s32.totalorder %s17, 1
    %p61 = por %p59, %p60
    %p63 = scmp.ne.s32.totalorder %s48, %s62
    %p64 = scmp.eq.s32.totalorder %s17, 0
    %p65 = por %p63, %p64
    %s67 = sadd.s32 %s66, 1
    %p70 = scmp.eq.s32.totalorder %s11, 1
    %p71 = scmp.ne.s32.totalorder %s66, %s68
    %p72 = scmp.eq.s32.totalorder %s11, 0
    %p73 = por %p71, %p72
    %p74 = scmp.ne.s32.totalorder %s66, %s68
    %p75 = scmp.eq.s32.totalorder %s16, 1
    %p76 = por %p74, %p75
    %p77 = scmp.ne.s32.totalorder %s68, %s69
    %p78 = scmp.eq.s32.totalorder %s16, 0
    %p79 = por %p77, %p78
    %p80 = scmp.ne.s32.totalorder %s68, %s69
    %p81 = scmp.eq.s32.totalorder %s17, 1
    %p82 = por %p80, %p81
    %p84 = scmp.ne.s32.totalorder %s69, %s83
    %p85 = scmp.eq.s32.totalorder %s17, 0
    %p86 = por %p84, %p85
    %s87 = ssub.s32 %s11, %s18
    %p88 = scmp.eq.s32.totalorder %s87, 0
    %s90 = sadd.s32 %s89, 1
    %s91 = scalar_select %p88, %s89, %s90
    %p94 = pneg %p88
    %p95 = scmp.eq.s32.totalorder %s11, 1
    %p96 = por %p94, %p95
    %p97 = scmp.ne.s32.totalorder %s89, %s92
    %p98 = scmp.eq.s32.totalorder %s11, 0
    %p99 = por %p97, %p98
    %p100 = scmp.ne.s32.totalorder %s89, %s92
    %p101 = scmp.eq.s32.totalorder %s16, 1
    %p102 = por %p100, %p101
    %p103 = scmp.ne.s32.totalorder %s92, %s93
    %p104 = scmp.eq.s32.totalorder %s16, 0
    %p105 = por %p103, %p104
    %p106 = scmp.ne.s32.totalorder %s92, %s93
    %p107 = scmp.eq.s32.totalorder %s17, 1
    %p108 = por %p106, %p107
    %p110 = scmp.ne.s32.totalorder %s93, %s109
    %p111 = scmp.eq.s32.totalorder %s17, 0
    %p112 = por %p110, %p111
    %s113 = ssub.s32 %s11, %s18
    %p114 = scmp.eq.s32.totalorder %s113, 0
    %s116 = sadd.s32 %s115, 1
    %s117 = scalar_select %p114, %s115, %s116
    %p120 = pneg %p114
    %p121 = scmp.eq.s32.totalorder %s11, 1
    %p122 = por %p120, %p121
    %p123 = scmp.ne.s32.totalorder %s115, %s118
    %p124 = scmp.eq.s32.totalorder %s11, 0
    %p125 = por %p123, %p124
    %p126 = scmp.ne.s32.totalorder %s115, %s118
    %p127 = scmp.eq.s32.totalorder %s16, 1
    %p128 = por %p126, %p127
    %p129 = scmp.ne.s32.totalorder %s118, %s119
    %p130 = scmp.eq.s32.totalorder %s16, 0
    %p131 = por %p129, %p130
    %p132 = scmp.ne.s32.totalorder %s118, %s119
    %p133 = scmp.eq.s32.totalorder %s17, 1
    %p134 = por %p132, %p133
    %p136 = scmp.ne.s32.totalorder %s119, %s135
    %p137 = scmp.eq.s32.totalorder %s17, 0
    %p138 = por %p136, %p137
    %p139 = scmp.le.s32.totalorder 1, %s11
    %p140 = scmp.lt.s32.totalorder %s11, 3
    %p141 = pnand %p139, %p140
    %p142 = pneg %p141
    // Predicated region
    $region9: #{conv_layer_forward.2} parent=5 // pred_check
      _
    $region10: #{conv_layer_forward.2} parent=5 // pred_check_branch
      %144 = sbr.rel (%p141) target = $region12
    $region11: #{conv_layer_forward.2} parent=5 // pred_region
      %s145 = ssub.s32 %s11, 1
      // Predicated region
      $region13: #{conv_layer_forward.2} parent=11 // pred_check
        %p146 = pneg %p58
      $region14: #{conv_layer_forward.2} parent=11 // pred_check_branch
        %148 = sbr.rel (%p146) target = $region16
      $region15: #{conv_layer_forward.2} parent=11 // pred_region
        _
      $region16: #{conv_layer_forward.2} parent=11 // pred_fallthru
        _
      // Predicated region
      $region17: #{conv_layer_forward.2} parent=11 // pred_check
        %p149 = pneg %p79
      $region18: #{conv_layer_forward.2} parent=11 // pred_check_branch
        %151 = sbr.rel (%p149) target = $region20
      $region19: #{conv_layer_forward.2} parent=11 // pred_region
        _
      $region20: #{conv_layer_forward.2} parent=11 // pred_fallthru
        _
    $region12: #{conv_layer_forward.2} parent=5 // pred_fallthru
      _
    %p152 = scmp.lt.s32.totalorder %s11, 2
    // Predicated region
    $region21: #{conv_layer_forward.2} parent=5 // pred_check
      %p153 = pneg %p152
    $region22: #{conv_layer_forward.2} parent=5 // pred_check_branch
      %155 = sbr.rel (%p153) target = $region24
    $region23: #{conv_layer_forward.2} parent=5 // pred_region
      // Predicated region
      $region25: #{conv_layer_forward.2} parent=23 // pred_check
        %p156 = pneg %p31
      $region26: #{conv_layer_forward.2} parent=23 // pred_check_branch
        %158 = sbr.rel (%p156) target = $region28
      $region27: #{conv_layer_forward.2} parent=23 // pred_region
        %p159 = scmp.lt.s32.totalorder %s11, 1
        %s160 = scalar_select %p159, %s11, 1
        %s161 = smul.addr %s160, 4
        %s162 = smul.addr %s161, 4
        %s163 = scalar_lea.vmem %s0, %s162
      $region28: #{conv_layer_forward.2} parent=23 // pred_fallthru
        _
    $region24: #{conv_layer_forward.2} parent=5 // pred_fallthru
      _
    %p164 = scmp.le.s32.totalorder 1, %s11
    %p165 = scmp.lt.s32.totalorder %s11, 3
    %p166 = pnand %p164, %p165
    %p167 = pneg %p166
    // Predicated region
    $region29: #{conv_layer_forward.2} parent=5 // pred_check
      _
    $region30: #{conv_layer_forward.2} parent=5 // pred_check_branch
      %169 = sbr.rel (%p166) target = $region32
    $region31: #{conv_layer_forward.2} parent=5 // pred_region
      %s170 = ssub.s32 %s11, 1
      %p171 = scmp.lt.s32.totalorder %s16, 1
      %s172 = scalar_select %p171, %s16, 1
      %s173 = smul.addr %s172, 4
      %s174 = smul.addr %s173, 4
      %s175 = scalar_lea.vmem %s0, %s174
      %p176 = pneg %p37
      %p177 = pneg %p34
      %p178 = pneg %p58
      %p179 = pneg %p55
      %p180 = pneg %p79
      %p181 = pneg %p76
      %p182 = pneg %p105
      %p183 = pneg %p102
      %p184 = scmp.lt.s32.totalorder %s16, 1
      %s185 = scalar_select %p184, %s16, 1
      %s186 = smul.addr %s185, 4
      %s187 = smul.addr %s186, 8
      %s188 = scalar_lea.vmem %s3, %s187
      %p189 = pneg %p131
      %p190 = pneg %p128
      %p191 = scmp.lt.s32.totalorder %s16, 1
      %s192 = scalar_select %p191, %s16, 1
      %s193 = smul.addr %s192, 2
      %s194 = scalar_lea.vmem %s4, %s193
      %p195 = scmp.lt.s32.totalorder %s16, 1
      %s196 = scalar_select %p195, %s16, 1
      %s197 = smul.addr %s196, 4
      %s198 = smul.addr %s197, 4
      %s199 = scalar_lea.vmem %s0, %s198
      %p200 = scmp.lt.s32.totalorder %s16, 1
      %s201 = scalar_select %p200, %s16, 1
      %s202 = smul.addr %s201, 4
      %s203 = smul.addr %s202, 8
      %s204 = scalar_lea.vmem %s3, %s203
      %p205 = scmp.lt.s32.totalorder %s16, 1
      %s206 = scalar_select %p205, %s16, 1
      %s207 = smul.addr %s206, 2
      %s208 = scalar_lea.vmem %s4, %s207
      %v210 = vld [vmem:[%s199] sm:$0xf]
      %v211 = vld [vmem:[%s199 + $0x4] sm:$0xf]
      %v212 = vld [vmem:[%s199 + $0x8] sm:$0xf]
      %v213 = vld [vmem:[%s199 + $0xc] sm:$0x3]
      %v218 = vunpack.c.l.b16 %v210
      %v219 = vunpack.c.l.b16 %v211
      %v220 = vunpack.c.l.b16 %v212
      %v221 = vunpack.c.l.b16 %v213
      %v222 = vpack.c.b16 %v219, %v218
      %v223 = vpack.c.b16 %v221, %v220
      %vm226 = vsmask.f32 7424
      %v228 = vshrl.u32 %v222, 16
      %v230 = vshll.u32 %v222, 16
      %v232 = vrot.slane %v230, 1
      %v233 = vor.u32 %v228, %v232
      %v235 = vshll.u32 %v223, 16
      %v237 = vrot.slane %v235, 1
      %v238 = vsel %vm226, %v233, %v237
      %v239 = vshrl.u32 %v223, 16
      %v241 = vor.u32 %v239, %v237
      %vm244 = vcmask 1046528
      %v245 = vrot.slane %v222, 1
      %v246 = vrot.slane %v223, 1
      %v247 = vsel %vm244, %v245, %v246
      %v250 = vld [vmem:[%s1] sm:$0xf]
      %v251 = vld [vmem:[%s1 + $0x4] sm:$0xf]
      %v252 = vld [vmem:[%s1 + $0x8] sm:$0xf]
      %v253 = vld [vmem:[%s1 + $0xc] sm:$0xf]
      %v254 = vld [vmem:[%s1 + $0x10] sm:$0xf]
      %v255 = vld [vmem:[%s1 + $0x14] sm:$0xf]
      %v256 = vld [vmem:[%s1 + $0x18] sm:$0xf]
      %v257 = vld [vmem:[%s1 + $0x1c] sm:$0xf]
      %v258 = vld [vmem:[%s1 + $0x20] sm:$0xf]
      %v259 = vld [vmem:[%s1 + $0x24] sm:$0xf]
      %v260 = vld [vmem:[%s1 + $0x28] sm:$0xf]
      %v261 = vld [vmem:[%s1 + $0x2c] sm:$0xf]
      %v262 = vld [vmem:[%s1 + $0x30] sm:$0xf]
      %v263 = vld [vmem:[%s1 + $0x34] sm:$0xf]
      %v264 = vld [vmem:[%s1 + $0x38] sm:$0xf]
      %v265 = vld [vmem:[%s1 + $0x3c] sm:$0xf]
      %v266 = vld [vmem:[%s1 + $0x40] sm:$0xf]
      %v267 = vld [vmem:[%s1 + $0x44] sm:$0xf]
      %v268 = vld [vmem:[%s1 + $0x48] sm:$0xf]
      %v269 = vld [vmem:[%s1 + $0x4c] sm:$0xf]
      %v270 = vld [vmem:[%s1 + $0x50] sm:$0xf]
      %v271 = vld [vmem:[%s1 + $0x54] sm:$0xf]
      %v272 = vld [vmem:[%s1 + $0x58] sm:$0xf]
      %v273 = vld [vmem:[%s1 + $0x5c] sm:$0xf]
      %v274 = vld [vmem:[%s1 + $0x60] sm:$0xf]
      %v275 = vld [vmem:[%s1 + $0x64] sm:$0xf]
      %v276 = vld [vmem:[%s1 + $0x68] sm:$0xf]
      %v277 = vld [vmem:[%s1 + $0x6c] sm:$0xf]
      %v278 = vld [vmem:[%s1 + $0x70] sm:$0xf]
      %v279 = vld [vmem:[%s1 + $0x74] sm:$0xf]
      %v280 = vld [vmem:[%s1 + $0x78] sm:$0xf]
      %v281 = vld [vmem:[%s1 + $0x7c] sm:$0xf]
      %v282 = vld [vmem:[%s1 + $0x80] sm:$0xf]
      %v283 = vld [vmem:[%s1 + $0x84] sm:$0xf]
      %v284 = vld [vmem:[%s1 + $0x88] sm:$0xf]
      %v285 = vld [vmem:[%s1 + $0x8c] sm:$0xf]
      %v286 = vld [vmem:[%s1 + $0x90] sm:$0xf]
      %v287 = vld [vmem:[%s1 + $0x94] sm:$0xf]
      %v288 = vld [vmem:[%s1 + $0x98] sm:$0xf]
      %v289 = vld [vmem:[%s1 + $0x9c] sm:$0xf]
      %v290 = vld [vmem:[%s1 + $0xa0] sm:$0xf]
      %v291 = vld [vmem:[%s1 + $0xa4] sm:$0xf]
      %v292 = vld [vmem:[%s1 + $0xa8] sm:$0xf]
      %v293 = vld [vmem:[%s1 + $0xac] sm:$0xf]
      %v294 = vld [vmem:[%s1 + $0xb0] sm:$0xf]
      %v295 = vld [vmem:[%s1 + $0xb4] sm:$0xf]
      %v296 = vld [vmem:[%s1 + $0xb8] sm:$0xf]
      %v297 = vld [vmem:[%s1 + $0xbc] sm:$0xf]
      %v298 = vld [vmem:[%s2] sm:$0x1]
      %v300 = vlaneseq
      %v301 = vshrl.u32 %v300, 7
      %v302 = vsub.s32 0, %v301
      %v303 = vrot.slane %v298, %v302
      %v353 = vunpack.c.l.b16 %v250
      %v354 = vunpack.c.l.b16 %v251
      %v355 = vunpack.c.l.b16 %v252
      %v356 = vunpack.c.l.b16 %v253
      %v357 = vunpack.c.l.b16 %v254
      %v358 = vunpack.c.l.b16 %v255
      %v359 = vunpack.c.l.b16 %v256
      %v360 = vunpack.c.l.b16 %v257
      %v361 = vunpack.c.l.b16 %v258
      %v362 = vunpack.c.l.b16 %v259
      %v363 = vunpack.c.l.b16 %v260
      %v364 = vunpack.c.l.b16 %v261
      %v365 = vunpack.c.l.b16 %v262
      %v366 = vunpack.c.l.b16 %v263
      %v367 = vunpack.c.l.b16 %v264
      %v368 = vunpack.c.l.b16 %v265
      %v369 = vunpack.c.l.b16 %v266
      %v370 = vunpack.c.l.b16 %v267
      %v371 = vunpack.c.l.b16 %v268
      %v372 = vunpack.c.l.b16 %v269
      %v373 = vunpack.c.l.b16 %v270
      %v374 = vunpack.c.l.b16 %v271
      %v375 = vunpack.c.l.b16 %v272
      %v376 = vunpack.c.l.b16 %v273
      %v377 = vunpack.c.l.b16 %v274
      %v378 = vunpack.c.l.b16 %v275
      %v379 = vunpack.c.l.b16 %v276
      %v380 = vunpack.c.l.b16 %v277
      %v381 = vunpack.c.l.b16 %v278
      %v382 = vunpack.c.l.b16 %v279
      %v383 = vunpack.c.l.b16 %v280
      %v384 = vunpack.c.l.b16 %v281
      %v385 = vunpack.c.l.b16 %v282
      %v386 = vunpack.c.l.b16 %v283
      %v387 = vunpack.c.l.b16 %v284
      %v388 = vunpack.c.l.b16 %v285
      %v389 = vunpack.c.l.b16 %v286
      %v390 = vunpack.c.l.b16 %v287
      %v391 = vunpack.c.l.b16 %v288
      %v392 = vunpack.c.l.b16 %v289
      %v393 = vunpack.c.l.b16 %v290
      %v394 = vunpack.c.l.b16 %v291
      %v395 = vunpack.c.l.b16 %v292
      %v396 = vunpack.c.l.b16 %v293
      %v397 = vunpack.c.l.b16 %v294
      %v398 = vunpack.c.l.b16 %v295
      %v399 = vunpack.c.l.b16 %v296
      %v400 = vunpack.c.l.b16 %v297
      %v401 = vpack.c.b16 %v354, %v353
      %v402 = vpack.c.b16 %v356, %v355
      %v403 = vpack.c.b16 %v358, %v357
      %v404 = vpack.c.b16 %v360, %v359
      %v405 = vpack.c.b16 %v362, %v361
      %v406 = vpack.c.b16 %v364, %v363
      %v407 = vpack.c.b16 %v366, %v365
      %v408 = vpack.c.b16 %v368, %v367
      %v409 = vpack.c.b16 %v370, %v369
      %v410 = vpack.c.b16 %v372, %v371
      %v411 = vpack.c.b16 %v374, %v373
      %v412 = vpack.c.b16 %v376, %v375
      %v413 = vpack.c.b16 %v378, %v377
      %v414 = vpack.c.b16 %v380, %v379
      %v415 = vpack.c.b16 %v382, %v381
      %v416 = vpack.c.b16 %v384, %v383
      %v417 = vpack.c.b16 %v386, %v385
      %v418 = vpack.c.b16 %v388, %v387
      %v419 = vpack.c.b16 %v390, %v389
      %v420 = vpack.c.b16 %v392, %v391
      %v421 = vpack.c.b16 %v394, %v393
      %v422 = vpack.c.b16 %v396, %v395
      %v423 = vpack.c.b16 %v398, %v397
      %v424 = vpack.c.b16 %v400, %v399
      %449 = vmatprep.subr.bf16.mxu0 0
      %450 = vmatpush1.bf16.msra.mxu0 %v401
      %451 = vmatprep.subr.bf16.mxu0 0
      %452 = vmatpush1.bf16.msra.mxu0 %v402
      %453 = vmatprep.subr.bf16.mxu0 0
      %454 = vmatpush1.bf16.msra.mxu0 %v403
      %455 = vmatprep.subr.bf16.mxu0 0
      %456 = vmatpush1.bf16.msra.mxu0 %v404
      %457 = vmatprep.subr.bf16.mxu0 0
      %458 = vmatpush1.bf16.msra.mxu0 %v405
      %459 = vmatprep.subr.bf16.mxu0 0
      %460 = vmatpush1.bf16.msra.mxu0 %v406
      %461 = vmatprep.subr.bf16.mxu0 0
      %462 = vmatpush1.bf16.msra.mxu0 %v407
      %463 = vmatprep.subr.bf16.mxu0 0
      %464 = vmatpush1.bf16.msra.mxu0 %v408
      %465 = vmatprep.subr.bf16.mxu0 0
      %466 = vmatpush1.bf16.msra.mxu0 %v409
      %467 = vmatprep.subr.bf16.mxu0 0
      %468 = vmatpush1.bf16.msra.mxu0 %v410
      %469 = vmatprep.subr.bf16.mxu0 0
      %470 = vmatpush1.bf16.msra.mxu0 %v411
      %471 = vmatprep.subr.bf16.mxu0 0
      %472 = vmatpush1.bf16.msra.mxu0 %v412
      %473 = vmatprep.subr.bf16.mxu0 0
      %474 = vmatpush1.bf16.msra.mxu0 %v413
      %475 = vmatprep.subr.bf16.mxu0 0
      %476 = vmatpush1.bf16.msra.mxu0 %v414
      %477 = vmatprep.subr.bf16.mxu0 0
      %478 = vmatpush1.bf16.msra.mxu0 %v415
      %479 = vmatprep.subr.bf16.mxu0 0
      %480 = vmatpush1.bf16.msra.mxu0 %v416
      %481 = vmatprep.mubr.bf16.mxu0 %v238
      %482 = vmatmul.mubr.bf16.gmra.mrb[0].mxu0 %v222
      %v483 = vpop.f32.mrb[0].mxu0
      %v484 = vadd.f32 %v303, %v483
      %v485 = vpop.f32.mrb[0].mxu0
      %v486 = vpop.f32.mrb[0].mxu0
      %v487 = vadd.f32 %v303, %v486
      %v488 = vpop.f32.mrb[0].mxu0
      %489 = vmatprep.mubr.bf16.mxu0 %v241
      %490 = vmatmul.mubr.bf16.gmra.mrb[0].mxu0 %v223
      %v491 = vpop.f32.mrb[0].mxu0
      %v492 = vadd.f32 %v303, %v491
      %v493 = vpop.f32.mrb[0].mxu0
      %v494 = vpop.f32.mrb[0].mxu0
      %v495 = vadd.f32 %v303, %v494
      %v496 = vpop.f32.mrb[0].mxu0
      %497 = vdwg.mxu0
      %498 = vmatprep.subr.bf16.mxu0 0
      %499 = vmatpush1.bf16.msra.mxu0 %v417
      %500 = vmatprep.subr.bf16.mxu0 0
      %501 = vmatpush1.bf16.msra.mxu0 %v418
      %502 = vmatprep.subr.bf16.mxu0 0
      %503 = vmatpush1.bf16.msra.mxu0 %v419
      %504 = vmatprep.subr.bf16.mxu0 0
      %505 = vmatpush1.bf16.msra.mxu0 %v420
      %506 = vmatprep.subr.bf16.mxu0 0
      %507 = vmatpush1.bf16.msra.mxu0 %v421
      %508 = vmatprep.subr.bf16.mxu0 0
      %509 = vmatpush1.bf16.msra.mxu0 %v422
      %510 = vmatprep.subr.bf16.mxu0 0
      %511 = vmatpush1.bf16.msra.mxu0 %v423
      %512 = vmatprep.subr.bf16.mxu0 0
      %513 = vmatpush1.bf16.msra.mxu0 %v424
      %514 = vmatprep.subr.bf16.mxu0 0
      %515 = vmatpush1.bf16.msra.mxu0 0
      %516 = vmatprep.subr.bf16.mxu0 0
      %517 = vmatpush1.bf16.msra.mxu0 0
      %518 = vmatprep.subr.bf16.mxu0 0
      %519 = vmatpush1.bf16.msra.mxu0 0
      %520 = vmatprep.subr.bf16.mxu0 0
      %521 = vmatpush1.bf16.msra.mxu0 0
      %522 = vmatprep.subr.bf16.mxu0 0
      %523 = vmatpush1.bf16.msra.mxu0 0
      %524 = vmatprep.subr.bf16.mxu0 0
      %525 = vmatpush1.bf16.msra.mxu0 0
      %526 = vmatprep.subr.bf16.mxu0 0
      %527 = vmatpush1.bf16.msra.mxu0 0
      %528 = vmatprep.subr.bf16.mxu0 0
      %529 = vmatpush1.bf16.msra.mxu0 0
      %530 = vmatprep.mubr.bf16.mxu0 0
      %531 = vmatmul.mubr.bf16.gmra.mrb[0].mxu0 %v247
      %v532 = vpop.f32.mrb[0].mxu0
      %v533 = vadd.f32 %v484, %v532
      %v534 = vpop.f32.mrb[0].mxu0
      %v535 = vpop.f32.mrb[0].mxu0
      %v536 = vadd.f32 %v487, %v535
      %v537 = vpop.f32.mrb[0].mxu0
      %538 = vmatprep.mubr.bf16.mxu0 0
      %539 = vmatmul.mubr.bf16.gmra.mrb[0].mxu0 %v246
      %v540 = vpop.f32.mrb[0].mxu0
      %v541 = vadd.f32 %v492, %v540
      %v542 = vpop.f32.mrb[0].mxu0
      %v543 = vpop.f32.mrb[0].mxu0
      %v544 = vadd.f32 %v495, %v543
      %v545 = vpop.f32.mrb[0].mxu0
      %546 = vdwg.mxu0
      %547 = vst [vmem:[%s204] sm:$0xff] %v533
      %548 = vst [vmem:[%s204 + $0x8] sm:$0xff] %v536
      %549 = vst [vmem:[%s204 + $0x10] sm:$0xff] %v541
      %550 = vst [vmem:[%s204 + $0x18] sm:$0x3] %v544
      %v551 = vadd.f32 %v533, %v536
      %v552 = vadd.f32 %v551, %v541
      %vm553 = vcmask 1041408
      %v554 = vsel %vm553, %v544, 0.0
      %v555 = vadd.f32 %v552, %v554
      %v556 = vrot.slane %v555, 4
      %v557 = vadd.f32 %v555, %v556
      %v558 = vrot.slane %v557, 2
      %v559 = vadd.f32 %v557, %v558
      %v560 = vrot.slane %v559, 1
      %v561 = vadd.f32 %v559, %v560
      %v562 = vmul.f32 %v533, %v533
      %v563 = vmul.f32 %v536, %v536
      %v564 = vmul.f32 %v541, %v541
      %v565 = vmul.f32 %v544, %v544
      %v566 = vadd.f32 %v562, %v563
      %v567 = vadd.f32 %v566, %v564
      %v568 = vsel %vm553, %v565, 0.0
      %v569 = vadd.f32 %v567, %v568
      %v570 = vrot.slane %v569, 4
      %v571 = vadd.f32 %v569, %v570
      %v572 = vrot.slane %v571, 2
      %v573 = vadd.f32 %v571, %v572
      %v574 = vrot.slane %v573, 1
      %v575 = vadd.f32 %v573, %v574
      %vm576 = vcmask 1040384
      %v577 = vsel %vm576, %v561, %v575
      %578 = vst [vmem:[%s208] sm:$0x3] %v577
      %p579 = scmp.lt.s32.totalorder %s16, 1
      %s580 = scalar_select %p579, %s16, 1
      %s581 = smul.addr %s580, 4
      %s582 = smul.addr %s581, 8
      %s583 = scalar_lea.vmem %s3, %s582
      %p584 = scmp.lt.s32.totalorder %s16, 1
      %s585 = scalar_select %p584, %s16, 1
      %s586 = smul.addr %s585, 2
      %s587 = scalar_lea.vmem %s4, %s586
      // Predicated region
      $region33: #{conv_layer_forward.2} parent=31 // pred_check
        %p588 = pneg %p102
      $region34: #{conv_layer_forward.2} parent=31 // pred_check_branch
        %590 = sbr.rel (%p588) target = $region36
      $region35: #{conv_layer_forward.2} parent=31 // pred_region
        _
      $region36: #{conv_layer_forward.2} parent=31 // pred_fallthru
        _
      // Predicated region
      $region37: #{conv_layer_forward.2} parent=31 // pred_check
        %p591 = pneg %p128
      $region38: #{conv_layer_forward.2} parent=31 // pred_check_branch
        %593 = sbr.rel (%p591) target = $region40
      $region39: #{conv_layer_forward.2} parent=31 // pred_region
        _
      $region40: #{conv_layer_forward.2} parent=31 // pred_fallthru
        _
    $region32: #{conv_layer_forward.2} parent=5 // pred_fallthru
      _
    %p594 = scmp.le.s32.totalorder 2, %s11
    // Predicated region
    $region41: #{conv_layer_forward.2} parent=5 // pred_check
      %p595 = pneg %p594
    $region42: #{conv_layer_forward.2} parent=5 // pred_check_branch
      %597 = sbr.rel (%p595) target = $region44
    $region43: #{conv_layer_forward.2} parent=5 // pred_region
      %s598 = ssub.s32 %s11, 2
      // Predicated region
      $region45: #{conv_layer_forward.2} parent=43 // pred_check
        %p599 = pneg %p108
      $region46: #{conv_layer_forward.2} parent=43 // pred_check_branch
        %601 = sbr.rel (%p599) target = $region48
      $region47: #{conv_layer_forward.2} parent=43 // pred_region
        %p602 = scmp.lt.s32.totalorder %s17, 1
        %s603 = scalar_select %p602, %s17, 1
        %s604 = smul.addr %s603, 4
        %s605 = smul.addr %s604, 8
        %s606 = scalar_lea.vmem %s3, %s605
      $region48: #{conv_layer_forward.2} parent=43 // pred_fallthru
        _
      // Predicated region
      $region49: #{conv_layer_forward.2} parent=43 // pred_check
        %p607 = pneg %p134
      $region50: #{conv_layer_forward.2} parent=43 // pred_check_branch
        %609 = sbr.rel (%p607) target = $region52
      $region51: #{conv_layer_forward.2} parent=43 // pred_region
        %p610 = scmp.lt.s32.totalorder %s17, 1
        %s611 = scalar_select %p610, %s17, 1
        %s612 = smul.addr %s611, 2
        %s613 = scalar_lea.vmem %s4, %s612
      $region52: #{conv_layer_forward.2} parent=43 // pred_fallthru
        _
    $region44: #{conv_layer_forward.2} parent=5 // pred_fallthru
      _
  $region6: #{conv_layer_forward.2} parent=0 // loop_footer
    %s15 = sadd.s32 1, %s11
  $region7: #{conv_layer_forward.2} parent=0 // loop_footer_branch
    %10 = sbr.rel target = $region3
  $region8: #{conv_layer_forward.2} parent=0 // loop_exit
    _

</llo_original>
